<compile_context>
chip_gen: v7x
topology: tpu7x:2x2x1
jax: 0.10.0
libtpu: 0.0.40
codegen_flags: <defaults>
</compile_context>

<pallas_src>
import math
import jax
import jax.numpy as jnp
from jax.experimental import pallas as pl
from jax.experimental.pallas import tpu as pltpu


def medium_block_kernel(x_ref, w1_ref, b1_ref, w2_ref, b2_ref, o_ref):
    # fc1 on the MXU: (TB, nInput)bf16 @ (nInput, 10)bf16 -> f32 accumulate.
    h = jnp.dot(x_ref[...], w1_ref[...], preferred_element_type=jnp.float32)
    h = h + b1_ref[...]
    h = jnp.where(h > 0, h, 0.1 * h)                       # LeakyReLU(0.1)

    # fc2 (10 -> 1): VPU multiply + XLU lane reduce.  An N=1 MXU matmul would
    # use 1/128 of the result columns and pay the full result-FIFO drain.
    y = jnp.sum(h * w2_ref[...], axis=-1, keepdims=True)   # (TB, 1) f32
    y = y + b2_ref[0]                                      # fc2 bias from SMEM
    y = jnp.where(y > 0, y, 0.1 * y)                       # LeakyReLU(0.1)

    # Lane-dense store: relayout the (TB, 1) column into a (1, TB) row (XLU),
    # so output writes are unmasked full-lane stores.
    o_ref[...] = jnp.transpose(y).astype(o_ref.dtype)


def _round_up(x, m):
    return (x + m - 1) // m * m


def medium_block_forward(x, w1, b1, w2, b2, *, block_rows=1024):
    """x: (B, nInput) f32; w1: (nInput, 10); b1: (1, 10) or (10,);
    w2: (10, 1); b2: (1, 1) or (1,).  Returns (B, 1) f32.

    block_rows: batch-tile size; sweep 512-2048 on large batches.  Keep the
    double-buffered bf16 x tiles + f32 intermediates within VMEM budget
    (v7x has only 64 MiB physical / 32 MiB scoped).
    """
    B, n_input = x.shape
    hidden = w1.shape[1]

    # bf16 for the dominant HBM stream (x) and w1; everything else stays f32.
    x_bf = x.astype(jnp.bfloat16)
    w1_bf = w1.astype(jnp.bfloat16)
    b1_f = jnp.asarray(b1, jnp.float32).reshape(1, hidden)
    w2_row = jnp.asarray(w2, jnp.float32).reshape(1, hidden)   # fc2 weight as a row
    b2_s = jnp.asarray(b2, jnp.float32).reshape(1)             # fc2 bias -> SMEM scalar

    # Lane-aligned row tile (multiple of 128 so the (1, TB) output block is
    # lane-dense); pad the batch so it divides evenly into tiles.
    tb = min(_round_up(block_rows, 128), _round_up(B, 128))
    b_pad = _round_up(B, tb)
    if b_pad != B:
        x_bf = jnp.pad(x_bf, ((0, b_pad - B), (0, 0)))
    num_tiles = b_pad // tb

    out = pl.pallas_call(
        medium_block_kernel,
        out_shape=jax.ShapeDtypeStruct((1, b_pad), jnp.float32),
        grid=(num_tiles,),
        in_specs=[
            # x: tiled over the batch; auto-pipelined / double-buffered.
            pl.BlockSpec((tb, n_input), lambda i: (i, 0)),
            # Weights & fc1 bias: constant index maps -> single DMA, resident.
            pl.BlockSpec((n_input, hidden), lambda i: (0, 0)),
            pl.BlockSpec((1, hidden), lambda i: (0, 0)),
            pl.BlockSpec((1, hidden), lambda i: (0, 0)),
            # fc2 bias: scalar in SMEM instead of a padded (1,1) VMEM tile.
            pl.BlockSpec(memory_space=pltpu.MemorySpace.SMEM),
        ],
        out_specs=pl.BlockSpec((1, tb), lambda i: (0, i)),
        compiler_params=pltpu.CompilerParams(
            dimension_semantics=("parallel",),       # megacore / dual-TC on v7x
            vmem_limit_bytes=32 * 1024 * 1024,       # v5e default is only 16 MiB
        ),
    )(x_bf, w1_bf, b1_f, w2_row, b2_s)

    # (1, b_pad) row-major is batch order; drop padding rows, restore (B, 1).
    return out.reshape(b_pad, 1)[:B]


def init_params(key, n_input, hidden=10, out_dim=1):
    """Deterministic init mimicking PyTorch nn.Linear default (uniform +/- 1/sqrt(fan_in))."""
    k1, k2, k3, k4 = jax.random.split(key, 4)
    bound1 = 1.0 / math.sqrt(n_input)
    bound2 = 1.0 / math.sqrt(hidden)
    # Stored pre-transposed: (in, out)
    w1 = jax.random.uniform(k1, (n_input, hidden), jnp.float32, -bound1, bound1)
    b1 = jax.random.uniform(k2, (1, hidden), jnp.float32, -bound1, bound1)
    w2 = jax.random.uniform(k3, (hidden, out_dim), jnp.float32, -bound2, bound2)
    b2 = jax.random.uniform(k4, (1, out_dim), jnp.float32, -bound2, bound2)
    return w1, b1, w2, b2


def reference_forward(x, w1, b1, w2, b2):
    """Pure-JAX reference with the same bf16 first-layer inputs / f32 accum."""
    lrelu = lambda v: jnp.where(v > 0, v, 0.1 * v)
    h = jnp.dot(x.astype(jnp.bfloat16), w1.astype(jnp.bfloat16),
                preferred_element_type=jnp.float32) + jnp.asarray(b1, jnp.float32).reshape(1, -1)
    h = lrelu(h)
    y = jnp.sum(h * jnp.asarray(w2, jnp.float32).reshape(1, -1),
                axis=-1, keepdims=True) + jnp.asarray(b2, jnp.float32).reshape(1, 1)
    return lrelu(y)


if __name__ == "__main__":
    key = jax.random.PRNGKey(0)
    kx, kp = jax.random.split(key)

    batch = 300       # deliberately NOT a multiple of the row tile
    n_input = 32      # nInput

    x = jax.random.normal(kx, (batch, n_input), dtype=jnp.float32)
    w1, b1, w2, b2 = init_params(kp, n_input)

    # Small row tile here so the demo exercises the multi-step grid + padding;
    # production batches should use the default (sweep 512-2048).
    out = medium_block_forward(x, w1, b1, w2, b2, block_rows=128)
    out = jax.block_until_ready(out)

    ref = reference_forward(x, w1, b1, w2, b2)
    assert out.shape == (batch, 1), out.shape
    assert jnp.allclose(out, ref, atol=1e-4, rtol=1e-4), "mismatch vs reference"

    print("KERNEL_OK")
</pallas_src>

<mosaic_0001>
module attributes {stable_mosaic.version = 11 : i64} {
  func.func @medium_block_kernel(%arg0: i32, %arg1: memref<128x32xbf16, #tpu.memory_space<vmem>>, %arg2: memref<32x10xbf16, #tpu.memory_space<vmem>>, %arg3: memref<1x10xf32, #tpu.memory_space<vmem>>, %arg4: memref<1x10xf32, #tpu.memory_space<vmem>>, %arg5: memref<1xf32, #tpu.memory_space<smem>>, %arg6: memref<1x128xf32, #tpu.memory_space<vmem>>) attributes {dimension_semantics = [#tpu.dimension_semantics<parallel>], iteration_bounds = array<i64: 3>, scalar_prefetch = 0 : i64, scratch_operands = 0 : i64, tpu.core_type = #tpu.core_type<tc>, window_params = [{transform_indices = @transform_0, window_bounds = array<i64: 128, 32>}, {pipeline_mode = #tpu.pipeline_mode<synchronous>, transform_indices = @transform_1, window_bounds = array<i64: 32, 10>}, {pipeline_mode = #tpu.pipeline_mode<synchronous>, transform_indices = @transform_2, window_bounds = array<i64: 1, 10>}, {pipeline_mode = #tpu.pipeline_mode<synchronous>, transform_indices = @transform_3, window_bounds = array<i64: 1, 10>}, {transform_indices = @transform_4, window_bounds = array<i64: 1>}, {transform_indices = @transform_5, window_bounds = array<i64: 1, 128>}]} {
    %c0 = arith.constant 0 : index
    %c0_0 = arith.constant 0 : index
    %0 = vector.load %arg1[%c0, %c0_0] : memref<128x32xbf16, #tpu.memory_space<vmem>>, vector<128x32xbf16>
    %c0_1 = arith.constant 0 : index
    %c0_2 = arith.constant 0 : index
    %1 = vector.load %arg2[%c0_1, %c0_2] : memref<32x10xbf16, #tpu.memory_space<vmem>>, vector<32x10xbf16>
    %cst = arith.constant dense<0.000000e+00> : vector<128x10xf32>
    %2 = tpu.matmul %0, %1, %cst {dimension_numbers = #tpu.dot_dimension_numbers<[1], [0], [0], [1], [0, 0, 1, 1], [], []>} : vector<128x32xbf16>, vector<32x10xbf16>, vector<128x10xf32> -> vector<128x10xf32>
    %c0_3 = arith.constant 0 : index
    %c0_4 = arith.constant 0 : index
    %3 = vector.load %arg3[%c0_3, %c0_4] : memref<1x10xf32, #tpu.memory_space<vmem>>, vector<1x10xf32>
    %4 = vector.broadcast %3 : vector<1x10xf32> to vector<128x10xf32>
    %5 = arith.addf %2, %4 : vector<128x10xf32>
    %cst_5 = arith.constant 0.000000e+00 : f32
    %6 = vector.broadcast %cst_5 : f32 to vector<128x10xf32>
    %7 = arith.cmpf ogt, %5, %6 : vector<128x10xf32>
    %cst_6 = arith.constant 1.000000e-01 : f32
    %8 = vector.broadcast %cst_6 : f32 to vector<128x10xf32>
    %9 = arith.mulf %8, %5 : vector<128x10xf32>
    %10 = arith.select %7, %5, %9 : vector<128x10xi1>, vector<128x10xf32>
    %c0_7 = arith.constant 0 : index
    %c0_8 = arith.constant 0 : index
    %11 = vector.load %arg4[%c0_7, %c0_8] : memref<1x10xf32, #tpu.memory_space<vmem>>, vector<1x10xf32>
    %12 = vector.broadcast %11 : vector<1x10xf32> to vector<128x10xf32>
    %13 = arith.mulf %10, %12 : vector<128x10xf32>
    %cst_9 = arith.constant dense<0.000000e+00> : vector<128xf32>
    %14 = vector.multi_reduction <add>, %13, %cst_9 [1] : vector<128x10xf32> to vector<128xf32>
    %15 = vector.shape_cast %14 : vector<128xf32> to vector<128x1xf32>
    %c0_10 = arith.constant 0 : index
    %16 = memref.load %arg5[%c0_10] : memref<1xf32, #tpu.memory_space<smem>>
    %17 = vector.broadcast %16 : f32 to vector<128x1xf32>
    %18 = arith.addf %15, %17 : vector<128x1xf32>
    %cst_11 = arith.constant 0.000000e+00 : f32
    %19 = vector.broadcast %cst_11 : f32 to vector<128x1xf32>
    %20 = arith.cmpf ogt, %18, %19 : vector<128x1xf32>
    %cst_12 = arith.constant 1.000000e-01 : f32
    %21 = vector.broadcast %cst_12 : f32 to vector<128x1xf32>
    %22 = arith.mulf %21, %18 : vector<128x1xf32>
    %23 = arith.select %20, %18, %22 : vector<128x1xi1>, vector<128x1xf32>
    %24 = tpu.transpose %23, [1, 0] : vector<128x1xf32> -> vector<1x128xf32>
    %c0_13 = arith.constant 0 : index
    %c0_14 = arith.constant 0 : index
    %25 = vector.load %arg6[%c0_13, %c0_14] : memref<1x128xf32, #tpu.memory_space<vmem>>, vector<1x128xf32>
    tpu.vector_store %arg6[%c0_13, %c0_14], %24 {strides = array<i32>} : memref<1x128xf32, #tpu.memory_space<vmem>>, vector<1x128xf32>,
    return
  }
  func.func @transform_0(%arg0: i32) -> (i32, i32) {
    %c0_i32 = arith.constant 0 : i32
    %c0_i32_0 = arith.constant 0 : i32
    return %arg0, %c0_i32 : i32, i32
  }
  func.func @transform_1(%arg0: i32) -> (i32, i32) {
    %c0_i32 = arith.constant 0 : i32
    %c0_i32_0 = arith.constant 0 : i32
    %c0_i32_1 = arith.constant 0 : i32
    return %c0_i32, %c0_i32_0 : i32, i32
  }
  func.func @transform_2(%arg0: i32) -> (i32, i32) {
    %c0_i32 = arith.constant 0 : i32
    %c0_i32_0 = arith.constant 0 : i32
    %c0_i32_1 = arith.constant 0 : i32
    return %c0_i32, %c0_i32_0 : i32, i32
  }
  func.func @transform_3(%arg0: i32) -> (i32, i32) {
    %c0_i32 = arith.constant 0 : i32
    %c0_i32_0 = arith.constant 0 : i32
    %c0_i32_1 = arith.constant 0 : i32
    return %c0_i32, %c0_i32_0 : i32, i32
  }
  func.func @transform_4(%arg0: i32) -> i32 {
    %c0_i32 = arith.constant 0 : i32
    %c0_i32_0 = arith.constant 0 : i32
    return %c0_i32 : i32
  }
  func.func @transform_5(%arg0: i32) -> (i32, i32) {
    %c0_i32 = arith.constant 0 : i32
    %c0_i32_0 = arith.constant 0 : i32
    return %c0_i32, %arg0 : i32, i32
  }
}

</mosaic_0001>

<llo_original>
// kernel: tpu_custom_call.1
$region0: #{tpu_custom_call.1}
  #allocation0 [shape = 'u32[]', space=smem, size = 0x4, offset = 0x4, fixed_abs, tag = 'smem constant byte address 0x4 - core index']
  #allocation1 [shape = 'u32[144,128]{1,0:T(1,128)}', space=vmem, size = 0x12000, scoped, tag = 'internal scratch']
  #allocation2 [shape = 'f32[1]{0:T(128)S(6)}', space=smem, size = 0x200, scoped, tag = 'scoped memory for tpu_custom_call.1']
  %s0 = inlined_call_operand.vmem [shape: bf16[384,32], index: 0, kind: input, shape index: {}]
  %s1 = inlined_call_operand.vmem [shape: bf16[32,10], index: 1, kind: input, shape index: {}]
  %s2 = inlined_call_operand.vmem [shape: f32[1,10], index: 2, kind: input, shape index: {}]
  %s3 = inlined_call_operand.vmem [shape: f32[1,10], index: 3, kind: input, shape index: {}]
  %s4 = inlined_call_operand.<no memory space> [shape: f32[1], index: 4, kind: input, shape index: {}]
  %s5 = inlined_call_operand.hbm [shape: f32[1,384], index: 5, kind: output, shape index: {}]
  %s6 = sld [smem:[#allocation0]]
  $region53: #{tpu_custom_call.1} parent=0
    _
  %s8 = ssub.s32 1, %s6
  %s9 = scalar_select 0, %s8, %s6
  %10 = sst [smem:[#allocation2]] %s4
  $region1: #{tpu_custom_call.1} parent=0
    #allocation3 [shape = 'u8[1024]{0}', space=vmem, size = 0x400, scoped, tag = 'output window, operand 0']
    #allocation4 [shape = 's32[2]{0}', space=sflag, size = 0x8, scoped, tag = 'scoped memory for tpu_custom_call.1']
    %11 = vsyncpa [#allocation4], 0
    %s12 = scalar_lea.sflag [#allocation4], 1
    %13 = vsyncpa %s12, 0
    loop: start=0, step=1, limit=5
    $region2: #{tpu_custom_call.1} parent=1 // loop_pre_header
      _
    $region3: #{tpu_custom_call.1} parent=1 // loop_header
      %s15 = sphi 0, %s19
      %p16 = scmp.ge.s32.totalorder %s15, 5
      %s25 = sphi 0, %s27
      %s28 = sphi 0, %s25
      %s29 = sphi 0, %s28
      %s45 = sphi 0, %s29
      %s49 = sphi 0, %s49
      %s51 = sphi 0, %s49
      %s52 = sphi 0, %s51
      %s66 = sphi 0, %s52
      %s70 = sphi 0, %s70
      %s72 = sphi 0, %s70
      %s73 = sphi 0, %s72
      %s87 = sphi 0, %s73
      %s91 = sphi 0, %s91
      %s93 = sphi 0, %s91
      %s94 = sphi 0, %s93
      %s108 = sphi 0, %s94
      %s112 = sphi 0, %s112
      %s114 = sphi 0, %s112
      %s115 = sphi 0, %s114
      %s129 = sphi 0, %s115
      %s135 = sphi 0, %s137
      %s138 = sphi 0, %s135
      %s139 = sphi 0, %s138
      %s155 = sphi 0, %s139
    $region4: #{tpu_custom_call.1} parent=1 // loop_header_branch
      %18 = sbr.rel (%p16) target = $region8
    $region5: #{tpu_custom_call.1} parent=1 // loop_body
      %s20 = ssub.s32 %s15, 1
      %s21 = ssub.s32 %s15, 2
      %s22 = sadd.s32 %s15, 1
      %s23 = ssub.s32 %s15, %s22
      %p24 = scmp.eq.s32.totalorder %s23, 0
      %s26 = sadd.s32 %s25, 1
      %s27 = scalar_select %p24, %s25, %s26
      %p30 = pneg %p24
      %p31 = scmp.eq.s32.totalorder %s15, 2
      %p32 = por %p30, %p31
      %p33 = scmp.ne.s32.totalorder %s25, %s28
      %p34 = scmp.eq.s32.totalorder %s15, 0
      %p35 = por %p33, %p34
      %p36 = scmp.ne.s32.totalorder %s25, %s28
      %p37 = scmp.eq.s32.totalorder %s20, 2
      %p38 = por %p36, %p37
      %p39 = scmp.ne.s32.totalorder %s28, %s29
      %p40 = scmp.eq.s32.totalorder %s20, 0
      %p41 = por %p39, %p40
      %p42 = scmp.ne.s32.totalorder %s28, %s29
      %p43 = scmp.eq.s32.totalorder %s21, 2
      %p44 = por %p42, %p43
      %p46 = scmp.ne.s32.totalorder %s29, %s45
      %p47 = scmp.eq.s32.totalorder %s21, 0
      %p48 = por %p46, %p47
      %s50 = sadd.s32 %s49, 1
      %p53 = scmp.eq.s32.totalorder %s15, 2
      %p54 = scmp.ne.s32.totalorder %s49, %s51
      %p55 = scmp.eq.s32.totalorder %s15, 0
      %p56 = por %p54, %p55
      %p57 = scmp.ne.s32.totalorder %s49, %s51
      %p58 = scmp.eq.s32.totalorder %s20, 2
      %p59 = por %p57, %p58
      %p60 = scmp.ne.s32.totalorder %s51, %s52
      %p61 = scmp.eq.s32.totalorder %s20, 0
      %p62 = por %p60, %p61
      %p63 = scmp.ne.s32.totalorder %s51, %s52
      %p64 = scmp.eq.s32.totalorder %s21, 2
      %p65 = por %p63, %p64
      %p67 = scmp.ne.s32.totalorder %s52, %s66
      %p68 = scmp.eq.s32.totalorder %s21, 0
      %p69 = por %p67, %p68
      %s71 = sadd.s32 %s70, 1
      %p74 = scmp.eq.s32.totalorder %s15, 2
      %p75 = scmp.ne.s32.totalorder %s70, %s72
      %p76 = scmp.eq.s32.totalorder %s15, 0
      %p77 = por %p75, %p76
      %p78 = scmp.ne.s32.totalorder %s70, %s72
      %p79 = scmp.eq.s32.totalorder %s20, 2
      %p80 = por %p78, %p79
      %p81 = scmp.ne.s32.totalorder %s72, %s73
      %p82 = scmp.eq.s32.totalorder %s20, 0
      %p83 = por %p81, %p82
      %p84 = scmp.ne.s32.totalorder %s72, %s73
      %p85 = scmp.eq.s32.totalorder %s21, 2
      %p86 = por %p84, %p85
      %p88 = scmp.ne.s32.totalorder %s73, %s87
      %p89 = scmp.eq.s32.totalorder %s21, 0
      %p90 = por %p88, %p89
      %s92 = sadd.s32 %s91, 1
      %p95 = scmp.eq.s32.totalorder %s15, 2
      %p96 = scmp.ne.s32.totalorder %s91, %s93
      %p97 = scmp.eq.s32.totalorder %s15, 0
      %p98 = por %p96, %p97
      %p99 = scmp.ne.s32.totalorder %s91, %s93
      %p100 = scmp.eq.s32.totalorder %s20, 2
      %p101 = por %p99, %p100
      %p102 = scmp.ne.s32.totalorder %s93, %s94
      %p103 = scmp.eq.s32.totalorder %s20, 0
      %p104 = por %p102, %p103
      %p105 = scmp.ne.s32.totalorder %s93, %s94
      %p106 = scmp.eq.s32.totalorder %s21, 2
      %p107 = por %p105, %p106
      %p109 = scmp.ne.s32.totalorder %s94, %s108
      %p110 = scmp.eq.s32.totalorder %s21, 0
      %p111 = por %p109, %p110
      %s113 = sadd.s32 %s112, 1
      %p116 = scmp.eq.s32.totalorder %s15, 2
      %p117 = scmp.ne.s32.totalorder %s112, %s114
      %p118 = scmp.eq.s32.totalorder %s15, 0
      %p119 = por %p117, %p118
      %p120 = scmp.ne.s32.totalorder %s112, %s114
      %p121 = scmp.eq.s32.totalorder %s20, 2
      %p122 = por %p120, %p121
      %p123 = scmp.ne.s32.totalorder %s114, %s115
      %p124 = scmp.eq.s32.totalorder %s20, 0
      %p125 = por %p123, %p124
      %p126 = scmp.ne.s32.totalorder %s114, %s115
      %p127 = scmp.eq.s32.totalorder %s21, 2
      %p128 = por %p126, %p127
      %p130 = scmp.ne.s32.totalorder %s115, %s129
      %p131 = scmp.eq.s32.totalorder %s21, 0
      %p132 = por %p130, %p131
      %s133 = ssub.s32 %s15, %s22
      %p134 = scmp.eq.s32.totalorder %s133, 0
      %s136 = sadd.s32 %s135, 1
      %s137 = scalar_select %p134, %s135, %s136
      %p140 = pneg %p134
      %p141 = scmp.eq.s32.totalorder %s15, 2
      %p142 = por %p140, %p141
      %p143 = scmp.ne.s32.totalorder %s135, %s138
      %p144 = scmp.eq.s32.totalorder %s15, 0
      %p145 = por %p143, %p144
      %p146 = scmp.ne.s32.totalorder %s135, %s138
      %p147 = scmp.eq.s32.totalorder %s20, 2
      %p148 = por %p146, %p147
      %p149 = scmp.ne.s32.totalorder %s138, %s139
      %p150 = scmp.eq.s32.totalorder %s20, 0
      %p151 = por %p149, %p150
      %p152 = scmp.ne.s32.totalorder %s138, %s139
      %p153 = scmp.eq.s32.totalorder %s21, 2
      %p154 = por %p152, %p153
      %p156 = scmp.ne.s32.totalorder %s139, %s155
      %p157 = scmp.eq.s32.totalorder %s21, 0
      %p158 = por %p156, %p157
      %p159 = scmp.le.s32.totalorder 1, %s15
      %p160 = scmp.lt.s32.totalorder %s15, 4
      %p161 = pnand %p159, %p160
      %p162 = pneg %p161
      // Predicated region
      $region9: #{tpu_custom_call.1} parent=5 // pred_check
        _
      $region10: #{tpu_custom_call.1} parent=5 // pred_check_branch
        %164 = sbr.rel (%p161) target = $region12
      $region11: #{tpu_custom_call.1} parent=5 // pred_region
        %s165 = ssub.s32 %s15, 1
        // Predicated region
        $region13: #{tpu_custom_call.1} parent=11 // pred_check
          %p166 = pneg %p62
        $region14: #{tpu_custom_call.1} parent=11 // pred_check_branch
          %168 = sbr.rel (%p166) target = $region16
        $region15: #{tpu_custom_call.1} parent=11 // pred_region
          _
        $region16: #{tpu_custom_call.1} parent=11 // pred_fallthru
          _
        // Predicated region
        $region17: #{tpu_custom_call.1} parent=11 // pred_check
          %p169 = pneg %p83
        $region18: #{tpu_custom_call.1} parent=11 // pred_check_branch
          %171 = sbr.rel (%p169) target = $region20
        $region19: #{tpu_custom_call.1} parent=11 // pred_region
          _
        $region20: #{tpu_custom_call.1} parent=11 // pred_fallthru
          _
        // Predicated region
        $region21: #{tpu_custom_call.1} parent=11 // pred_check
          %p172 = pneg %p104
        $region22: #{tpu_custom_call.1} parent=11 // pred_check_branch
          %174 = sbr.rel (%p172) target = $region24
        $region23: #{tpu_custom_call.1} parent=11 // pred_region
          _
        $region24: #{tpu_custom_call.1} parent=11 // pred_fallthru
          _
        // Predicated region
        $region25: #{tpu_custom_call.1} parent=11 // pred_check
          %p175 = pneg %p125
        $region26: #{tpu_custom_call.1} parent=11 // pred_check_branch
          %177 = sbr.rel (%p175) target = $region28
        $region27: #{tpu_custom_call.1} parent=11 // pred_region
          _
        $region28: #{tpu_custom_call.1} parent=11 // pred_fallthru
          _
      $region12: #{tpu_custom_call.1} parent=5 // pred_fallthru
        _
      %p178 = scmp.lt.s32.totalorder %s15, 3
      // Predicated region
      $region29: #{tpu_custom_call.1} parent=5 // pred_check
        %p179 = pneg %p178
      $region30: #{tpu_custom_call.1} parent=5 // pred_check_branch
        %181 = sbr.rel (%p179) target = $region32
      $region31: #{tpu_custom_call.1} parent=5 // pred_region
        // Predicated region
        $region33: #{tpu_custom_call.1} parent=31 // pred_check
          %p182 = pneg %p35
        $region34: #{tpu_custom_call.1} parent=31 // pred_check_branch
          %184 = sbr.rel (%p182) target = $region36
        $region35: #{tpu_custom_call.1} parent=31 // pred_region
          %s185 = smul.u32 16, %s15
          %p186 = scmp.lt.s32.totalorder %s185, 47
          %s187 = scalar_select %p186, %s185, 47
          %s188 = smul.addr %s187, 4
          %s189 = scalar_lea.vmem %s0, %s188
          %s190 = smul.u32 16, %s15
        $region36: #{tpu_custom_call.1} parent=31 // pred_fallthru
          _
      $region32: #{tpu_custom_call.1} parent=5 // pred_fallthru
        _
      %p191 = scmp.le.s32.totalorder 1, %s15
      %p192 = scmp.lt.s32.totalorder %s15, 4
      %p193 = pnand %p191, %p192
      %p194 = pneg %p193
      // Predicated region
      $region37: #{tpu_custom_call.1} parent=5 // pred_check
        _
      $region38: #{tpu_custom_call.1} parent=5 // pred_check_branch
        %196 = sbr.rel (%p193) target = $region40
      $region39: #{tpu_custom_call.1} parent=5 // pred_region
        %s197 = ssub.s32 %s15, 1
        %s198 = smul.u32 16, %s20
        %p199 = scmp.lt.s32.totalorder %s198, 47
        %s200 = scalar_select %p199, %s198, 47
        %s201 = smul.addr %s200, 4
        %s202 = scalar_lea.vmem %s0, %s201
        %p203 = pneg %p41
        %p204 = pneg %p38
        %p205 = pneg %p62
        %p206 = pneg %p59
        %p207 = pneg %p83
        %p208 = pneg %p80
        %p209 = pneg %p104
        %p210 = pneg %p101
        %p211 = pneg %p125
        %p212 = pneg %p122
        %p213 = pneg %p151
        %p214 = pneg %p148
        %s215 = sand.u32 %s138, 1
        %s216 = scalar_lea.sflag [#allocation4], %s215
        %s217 = sand.u32 %s138, 1
        %s218 = scalar_lea.vmem [#allocation3], %s217
        %s219 = smul.u32 16, %s20
        %p220 = scmp.lt.s32.totalorder %s219, 47
        %s221 = scalar_select %p220, %s219, 47
        %s222 = smul.addr %s221, 4
        %s223 = scalar_lea.vmem %s0, %s222
        %s224 = smul.u32 16, %s20
        %v226 = vld [vmem:[%s223] sm:$0xf]
        %v227 = vld [vmem:[%s223 + $0x4] sm:$0xf]
        %v228 = vld [vmem:[%s223 + $0x8] sm:$0xf]
        %v229 = vld [vmem:[%s223 + $0xc] sm:$0xf]
        %v230 = vld [vmem:[%s223 + $0x10] sm:$0xf]
        %v231 = vld [vmem:[%s223 + $0x14] sm:$0xf]
        %v232 = vld [vmem:[%s223 + $0x18] sm:$0xf]
        %v233 = vld [vmem:[%s223 + $0x1c] sm:$0xf]
        %v234 = vld [vmem:[%s223 + $0x20] sm:$0xf]
        %v235 = vld [vmem:[%s223 + $0x24] sm:$0xf]
        %v236 = vld [vmem:[%s223 + $0x28] sm:$0xf]
        %v237 = vld [vmem:[%s223 + $0x2c] sm:$0xf]
        %v238 = vld [vmem:[%s223 + $0x30] sm:$0xf]
        %v239 = vld [vmem:[%s223 + $0x34] sm:$0xf]
        %v240 = vld [vmem:[%s223 + $0x38] sm:$0xf]
        %v241 = vld [vmem:[%s223 + $0x3c] sm:$0xf]
        %v242 = vld [vmem:[%s1] sm:$0xf]
        %v243 = vld [vmem:[%s1 + $0x4] sm:$0xf]
        %v244 = vld [vmem:[%s1 + $0x8] sm:$0xf]
        %v245 = vld [vmem:[%s1 + $0xc] sm:$0xf]
        %v246 = vld [vmem:[%s2] sm:$0x1]
        %v248 = vlaneseq
        %v249 = vshrl.u32 %v248, 7
        %v250 = vsub.s32 0, %v249
        %v251 = vrot.slane %v246, %v250
        %v269 = vunpack.c.l.b16 %v226
        %v270 = vunpack.c.l.b16 %v227
        %v271 = vunpack.c.l.b16 %v228
        %v272 = vunpack.c.l.b16 %v229
        %v273 = vunpack.c.l.b16 %v230
        %v274 = vunpack.c.l.b16 %v231
        %v275 = vunpack.c.l.b16 %v232
        %v276 = vunpack.c.l.b16 %v233
        %v277 = vunpack.c.l.b16 %v234
        %v278 = vunpack.c.l.b16 %v235
        %v279 = vunpack.c.l.b16 %v236
        %v280 = vunpack.c.l.b16 %v237
        %v281 = vunpack.c.l.b16 %v238
        %v282 = vunpack.c.l.b16 %v239
        %v283 = vunpack.c.l.b16 %v240
        %v284 = vunpack.c.l.b16 %v241
        %v285 = vpack.c.b16 %v270, %v269
        %v286 = vpack.c.b16 %v272, %v271
        %v287 = vpack.c.b16 %v274, %v273
        %v288 = vpack.c.b16 %v276, %v275
        %v289 = vpack.c.b16 %v278, %v277
        %v290 = vpack.c.b16 %v280, %v279
        %v291 = vpack.c.b16 %v282, %v281
        %v292 = vpack.c.b16 %v284, %v283
        %v297 = vunpack.c.l.b16 %v242
        %v298 = vunpack.c.l.b16 %v243
        %v299 = vunpack.c.l.b16 %v244
        %v300 = vunpack.c.l.b16 %v245
        %v301 = vpack.c.b16 %v298, %v297
        %v302 = vpack.c.b16 %v300, %v299
        %vm305 = vcmask 261120
        %v307 = vsel %vm305, %v285, 0
        %v310 = vsel %vm305, %v286, 0
        %v313 = vsel %vm305, %v287, 0
        %v316 = vsel %vm305, %v288, 0
        %v319 = vsel %vm305, %v289, 0
        %v322 = vsel %vm305, %v290, 0
        %v325 = vsel %vm305, %v291, 0
        %v328 = vsel %vm305, %v292, 0
        %330 = vmatprep.subr.bf16.mxu0 0
        %331 = vmatpush1.bf16.msra.mxu0 %v301
        %332 = vmatprep.subr.bf16.mxu0 0
        %333 = vmatpush1.bf16.msra.mxu0 %v302
        %334 = vmatprep.subr.bf16.mxu0 0
        %335 = vmatpush1.bf16.msra.mxu0 0
        %336 = vmatprep.subr.bf16.mxu0 0
        %337 = vmatpush1.bf16.msra.mxu0 0
        %338 = vmatprep.subr.bf16.mxu0 0
        %339 = vmatpush1.bf16.msra.mxu0 0
        %340 = vmatprep.subr.bf16.mxu0 0
        %341 = vmatpush1.bf16.msra.mxu0 0
        %342 = vmatprep.subr.bf16.mxu0 0
        %343 = vmatpush1.bf16.msra.mxu0 0
        %344 = vmatprep.subr.bf16.mxu0 0
        %345 = vmatpush1.bf16.msra.mxu0 0
        %346 = vmatprep.subr.bf16.mxu0 0
        %347 = vmatpush1.bf16.msra.mxu0 0
        %348 = vmatprep.subr.bf16.mxu0 0
        %349 = vmatpush1.bf16.msra.mxu0 0
        %350 = vmatprep.subr.bf16.mxu0 0
        %351 = vmatpush1.bf16.msra.mxu0 0
        %352 = vmatprep.subr.bf16.mxu0 0
        %353 = vmatpush1.bf16.msra.mxu0 0
        %354 = vmatprep.subr.bf16.mxu0 0
        %355 = vmatpush1.bf16.msra.mxu0 0
        %356 = vmatprep.subr.bf16.mxu0 0
        %357 = vmatpush1.bf16.msra.mxu0 0
        %358 = vmatprep.subr.bf16.mxu0 0
        %359 = vmatpush1.bf16.msra.mxu0 0
        %360 = vmatprep.subr.bf16.mxu0 0
        %361 = vmatpush1.bf16.msra.mxu0 0
        %362 = vmatprep.mubr.bf16.mxu0 0
        %363 = vmatmul.mubr.bf16.gmra.mrb[0].mxu0 %v307
        %v364 = vpop.f32.mrb[0].mxu0
        %v365 = vadd.f32 %v251, %v364
        %v366 = vpop.f32.mrb[0].mxu0
        %v367 = vpop.f32.mrb[0].mxu0
        %v368 = vadd.f32 %v251, %v367
        %v369 = vpop.f32.mrb[0].mxu0
        %370 = vmatprep.mubr.bf16.mxu0 0
        %371 = vmatmul.mubr.bf16.gmra.mrb[0].mxu0 %v310
        %v372 = vpop.f32.mrb[0].mxu0
        %v373 = vadd.f32 %v251, %v372
        %v374 = vpop.f32.mrb[0].mxu0
        %v375 = vpop.f32.mrb[0].mxu0
        %v376 = vadd.f32 %v251, %v375
        %v377 = vpop.f32.mrb[0].mxu0
        %378 = vmatprep.mubr.bf16.mxu0 0
        %379 = vmatmul.mubr.bf16.gmra.mrb[0].mxu0 %v313
        %v380 = vpop.f32.mrb[0].mxu0
        %v381 = vadd.f32 %v251, %v380
        %v382 = vpop.f32.mrb[0].mxu0
        %v383 = vpop.f32.mrb[0].mxu0
        %v384 = vadd.f32 %v251, %v383
        %v385 = vpop.f32.mrb[0].mxu0
        %386 = vmatprep.mubr.bf16.mxu0 0
        %387 = vmatmul.mubr.bf16.gmra.mrb[0].mxu0 %v316
        %v388 = vpop.f32.mrb[0].mxu0
        %v389 = vadd.f32 %v251, %v388
        %v390 = vpop.f32.mrb[0].mxu0
        %v391 = vpop.f32.mrb[0].mxu0
        %v392 = vadd.f32 %v251, %v391
        %v393 = vpop.f32.mrb[0].mxu0
        %394 = vmatprep.mubr.bf16.mxu0 0
        %395 = vmatmul.mubr.bf16.gmra.mrb[0].mxu0 %v319
        %v396 = vpop.f32.mrb[0].mxu0
        %v397 = vadd.f32 %v251, %v396
        %v398 = vpop.f32.mrb[0].mxu0
        %v399 = vpop.f32.mrb[0].mxu0
        %v400 = vadd.f32 %v251, %v399
        %v401 = vpop.f32.mrb[0].mxu0
        %402 = vmatprep.mubr.bf16.mxu0 0
        %403 = vmatmul.mubr.bf16.gmra.mrb[0].mxu0 %v322
        %v404 = vpop.f32.mrb[0].mxu0
        %v405 = vadd.f32 %v251, %v404
        %v406 = vpop.f32.mrb[0].mxu0
        %v407 = vpop.f32.mrb[0].mxu0
        %v408 = vadd.f32 %v251, %v407
        %v409 = vpop.f32.mrb[0].mxu0
        %410 = vmatprep.mubr.bf16.mxu0 0
        %411 = vmatmul.mubr.bf16.gmra.mrb[0].mxu0 %v325
        %v412 = vpop.f32.mrb[0].mxu0
        %v413 = vadd.f32 %v251, %v412
        %v414 = vpop.f32.mrb[0].mxu0
        %v415 = vpop.f32.mrb[0].mxu0
        %v416 = vadd.f32 %v251, %v415
        %v417 = vpop.f32.mrb[0].mxu0
        %418 = vmatprep.mubr.bf16.mxu0 0
        %419 = vmatmul.mubr.bf16.gmra.mrb[0].mxu0 %v328
        %v420 = vpop.f32.mrb[0].mxu0
        %v421 = vadd.f32 %v251, %v420
        %v422 = vpop.f32.mrb[0].mxu0
        %v423 = vpop.f32.mrb[0].mxu0
        %v424 = vadd.f32 %v251, %v423
        %v425 = vpop.f32.mrb[0].mxu0
        %426 = vdwg.mxu0
        %vm427 = vcmp.gt.f32.partialorder %v365, 0.0
        %vm428 = vcmp.gt.f32.partialorder %v368, 0.0
        %vm429 = vcmp.gt.f32.partialorder %v373, 0.0
        %vm430 = vcmp.gt.f32.partialorder %v376, 0.0
        %vm431 = vcmp.gt.f32.partialorder %v381, 0.0
        %vm432 = vcmp.gt.f32.partialorder %v384, 0.0
        %vm433 = vcmp.gt.f32.partialorder %v389, 0.0
        %vm434 = vcmp.gt.f32.partialorder %v392, 0.0
        %vm435 = vcmp.gt.f32.partialorder %v397, 0.0
        %vm436 = vcmp.gt.f32.partialorder %v400, 0.0
        %vm437 = vcmp.gt.f32.partialorder %v405, 0.0
        %vm438 = vcmp.gt.f32.partialorder %v408, 0.0
        %vm439 = vcmp.gt.f32.partialorder %v413, 0.0
        %vm440 = vcmp.gt.f32.partialorder %v416, 0.0
        %vm441 = vcmp.gt.f32.partialorder %v421, 0.0
        %vm442 = vcmp.gt.f32.partialorder %v424, 0.0
        %v443 = vmul.f32 %v365, 0.1
        %v444 = vmul.f32 %v368, 0.1
        %v445 = vmul.f32 %v373, 0.1
        %v446 = vmul.f32 %v376, 0.1
        %v447 = vmul.f32 %v381, 0.1
        %v448 = vmul.f32 %v384, 0.1
        %v449 = vmul.f32 %v389, 0.1
        %v450 = vmul.f32 %v392, 0.1
        %v451 = vmul.f32 %v397, 0.1
        %v452 = vmul.f32 %v400, 0.1
        %v453 = vmul.f32 %v405, 0.1
        %v454 = vmul.f32 %v408, 0.1
        %v455 = vmul.f32 %v413, 0.1
        %v456 = vmul.f32 %v416, 0.1
        %v457 = vmul.f32 %v421, 0.1
        %v458 = vmul.f32 %v424, 0.1
        %v459 = vsel %vm427, %v365, %v443
        %v460 = vsel %vm428, %v368, %v444
        %v461 = vsel %vm429, %v373, %v445
        %v462 = vsel %vm430, %v376, %v446
        %v463 = vsel %vm431, %v381, %v447
        %v464 = vsel %vm432, %v384, %v448
        %v465 = vsel %vm433, %v389, %v449
        %v466 = vsel %vm434, %v392, %v450
        %v467 = vsel %vm435, %v397, %v451
        %v468 = vsel %vm436, %v400, %v452
        %v469 = vsel %vm437, %v405, %v453
        %v470 = vsel %vm438, %v408, %v454
        %v471 = vsel %vm439, %v413, %v455
        %v472 = vsel %vm440, %v416, %v456
        %v473 = vsel %vm441, %v421, %v457
        %v474 = vsel %vm442, %v424, %v458
        %v475 = vld [vmem:[%s3] sm:$0x1]
        %v477 = vlaneseq
        %v478 = vshrl.u32 %v477, 7
        %v479 = vsub.s32 0, %v478
        %v480 = vrot.slane %v475, %v479
        %v482 = vmul.f32 %v459, %v480
        %v483 = vmul.f32 %v460, %v480
        %v484 = vmul.f32 %v461, %v480
        %v485 = vmul.f32 %v462, %v480
        %v486 = vmul.f32 %v463, %v480
        %v487 = vmul.f32 %v464, %v480
        %v488 = vmul.f32 %v465, %v480
        %v489 = vmul.f32 %v466, %v480
        %v490 = vmul.f32 %v467, %v480
        %v491 = vmul.f32 %v468, %v480
        %v492 = vmul.f32 %v469, %v480
        %v493 = vmul.f32 %v470, %v480
        %v494 = vmul.f32 %v471, %v480
        %v495 = vmul.f32 %v472, %v480
        %v496 = vmul.f32 %v473, %v480
        %v497 = vmul.f32 %v474, %v480
        %vm498 = vcmask 80896
        %v499 = vsel %vm498, %v482, 0.0
        %500 = vadd.xlane.f32.xlu0 %v499
        %v501 = vpop.xlane.xlu0 %500
        %v502 = vsel %vm498, %v483, 0.0
        %503 = vadd.xlane.f32.xlu0 %v502
        %v504 = vpop.xlane.xlu0 %503
        %v505 = vsel %vm498, %v484, 0.0
        %506 = vadd.xlane.f32.xlu0 %v505
        %v507 = vpop.xlane.xlu0 %506
        %v508 = vsel %vm498, %v485, 0.0
        %509 = vadd.xlane.f32.xlu0 %v508
        %v510 = vpop.xlane.xlu0 %509
        %v511 = vsel %vm498, %v486, 0.0
        %512 = vadd.xlane.f32.xlu0 %v511
        %v513 = vpop.xlane.xlu0 %512
        %v514 = vsel %vm498, %v487, 0.0
        %515 = vadd.xlane.f32.xlu0 %v514
        %v516 = vpop.xlane.xlu0 %515
        %v517 = vsel %vm498, %v488, 0.0
        %518 = vadd.xlane.f32.xlu0 %v517
        %v519 = vpop.xlane.xlu0 %518
        %v520 = vsel %vm498, %v489, 0.0
        %521 = vadd.xlane.f32.xlu0 %v520
        %v522 = vpop.xlane.xlu0 %521
        %v523 = vsel %vm498, %v490, 0.0
        %524 = vadd.xlane.f32.xlu0 %v523
        %v525 = vpop.xlane.xlu0 %524
        %v526 = vsel %vm498, %v491, 0.0
        %527 = vadd.xlane.f32.xlu0 %v526
        %v528 = vpop.xlane.xlu0 %527
        %v529 = vsel %vm498, %v492, 0.0
        %530 = vadd.xlane.f32.xlu0 %v529
        %v531 = vpop.xlane.xlu0 %530
        %v532 = vsel %vm498, %v493, 0.0
        %533 = vadd.xlane.f32.xlu0 %v532
        %v534 = vpop.xlane.xlu0 %533
        %v535 = vsel %vm498, %v494, 0.0
        %536 = vadd.xlane.f32.xlu0 %v535
        %v537 = vpop.xlane.xlu0 %536
        %v538 = vsel %vm498, %v495, 0.0
        %539 = vadd.xlane.f32.xlu0 %v538
        %v540 = vpop.xlane.xlu0 %539
        %v541 = vsel %vm498, %v496, 0.0
        %542 = vadd.xlane.f32.xlu0 %v541
        %v543 = vpop.xlane.xlu0 %542
        %v544 = vsel %vm498, %v497, 0.0
        %545 = vadd.xlane.f32.xlu0 %v544
        %v546 = vpop.xlane.xlu0 %545
        %s547 = sld [smem:[#allocation2]]
        %v548 = vstv %s547
        %v549 = vadd.f32 %v501, %v548
        %v550 = vadd.f32 %v504, %v548
        %v551 = vadd.f32 %v507, %v548
        %v552 = vadd.f32 %v510, %v548
        %v553 = vadd.f32 %v513, %v548
        %v554 = vadd.f32 %v516, %v548
        %v555 = vadd.f32 %v519, %v548
        %v556 = vadd.f32 %v522, %v548
        %v557 = vadd.f32 %v525, %v548
        %v558 = vadd.f32 %v528, %v548
        %v559 = vadd.f32 %v531, %v548
        %v560 = vadd.f32 %v534, %v548
        %v561 = vadd.f32 %v537, %v548
        %v562 = vadd.f32 %v540, %v548
        %v563 = vadd.f32 %v543, %v548
        %v564 = vadd.f32 %v546, %v548
        %vm565 = vcmp.gt.f32.partialorder %v549, 0.0
        %vm566 = vcmp.gt.f32.partialorder %v550, 0.0
        %vm567 = vcmp.gt.f32.partialorder %v551, 0.0
        %vm568 = vcmp.gt.f32.partialorder %v552, 0.0
        %vm569 = vcmp.gt.f32.partialorder %v553, 0.0
        %vm570 = vcmp.gt.f32.partialorder %v554, 0.0
        %vm571 = vcmp.gt.f32.partialorder %v555, 0.0
        %vm572 = vcmp.gt.f32.partialorder %v556, 0.0
        %vm573 = vcmp.gt.f32.partialorder %v557, 0.0
        %vm574 = vcmp.gt.f32.partialorder %v558, 0.0
        %vm575 = vcmp.gt.f32.partialorder %v559, 0.0
        %vm576 = vcmp.gt.f32.partialorder %v560, 0.0
        %vm577 = vcmp.gt.f32.partialorder %v561, 0.0
        %vm578 = vcmp.gt.f32.partialorder %v562, 0.0
        %vm579 = vcmp.gt.f32.partialorder %v563, 0.0
        %vm580 = vcmp.gt.f32.partialorder %v564, 0.0
        %v581 = vmul.f32 %v549, 0.1
        %v582 = vmul.f32 %v550, 0.1
        %v583 = vmul.f32 %v551, 0.1
        %v584 = vmul.f32 %v552, 0.1
        %v585 = vmul.f32 %v553, 0.1
        %v586 = vmul.f32 %v554, 0.1
        %v587 = vmul.f32 %v555, 0.1
        %v588 = vmul.f32 %v556, 0.1
        %v589 = vmul.f32 %v557, 0.1
        %v590 = vmul.f32 %v558, 0.1
        %v591 = vmul.f32 %v559, 0.1
        %v592 = vmul.f32 %v560, 0.1
        %v593 = vmul.f32 %v561, 0.1
        %v594 = vmul.f32 %v562, 0.1
        %v595 = vmul.f32 %v563, 0.1
        %v596 = vmul.f32 %v564, 0.1
        %v597 = vsel %vm565, %v549, %v581
        %v598 = vsel %vm566, %v550, %v582
        %v599 = vsel %vm567, %v551, %v583
        %v600 = vsel %vm568, %v552, %v584
        %v601 = vsel %vm569, %v553, %v585
        %v602 = vsel %vm570, %v554, %v586
        %v603 = vsel %vm571, %v555, %v587
        %v604 = vsel %vm572, %v556, %v588
        %v605 = vsel %vm573, %v557, %v589
        %v606 = vsel %vm574, %v558, %v590
        %v607 = vsel %vm575, %v559, %v591
        %v608 = vsel %vm576, %v560, %v592
        %v609 = vsel %vm577, %v561, %v593
        %v610 = vsel %vm578, %v562, %v594
        %v611 = vsel %vm579, %v563, %v595
        %v612 = vsel %vm580, %v564, %v596
        %613 = vxpose.xlu0.b32.start [1/16] %v597, 128
        %614 = vxpose.xlu0.b32.cont [2/16] %v598, 128
        %615 = vxpose.xlu0.b32.cont [3/16] %v599, 128
        %616 = vxpose.xlu0.b32.cont [4/16] %v600, 128
        %617 = vxpose.xlu0.b32.cont [5/16] %v601, 128
        %618 = vxpose.xlu0.b32.cont [6/16] %v602, 128
        %619 = vxpose.xlu0.b32.cont [7/16] %v603, 128
        %620 = vxpose.xlu0.b32.cont [8/16] %v604, 128
        %621 = vxpose.xlu0.b32.cont [9/16] %v605, 128
        %622 = vxpose.xlu0.b32.cont [10/16] %v606, 128
        %623 = vxpose.xlu0.b32.cont [11/16] %v607, 128
        %624 = vxpose.xlu0.b32.cont [12/16] %v608, 128
        %625 = vxpose.xlu0.b32.cont [13/16] %v609, 128
        %626 = vxpose.xlu0.b32.cont [14/16] %v610, 128
        %627 = vxpose.xlu0.b32.cont [15/16] %v611, 128
        %628 = vxpose.xlu0.b32.end [16/16] %v612, 128
        %v629 = vpop.trf.xlu0
        %v630 = vpop.trf.xlu0
        %v631 = vpop.trf.xlu0
        %v632 = vpop.trf.xlu0
        %v633 = vpop.trf.xlu0
        %v634 = vpop.trf.xlu0
        %v635 = vpop.trf.xlu0
        %v636 = vpop.trf.xlu0
        %v637 = vpop.trf.xlu0
        %v638 = vpop.trf.xlu0
        %v639 = vpop.trf.xlu0
        %v640 = vpop.trf.xlu0
        %v641 = vpop.trf.xlu0
        %v642 = vpop.trf.xlu0
        %v643 = vpop.trf.xlu0
        %v644 = vpop.trf.xlu0
        %645 = vst [vmem:[%s218] sm:$0x1] %v629
        %s646 = sand.u32 %s138, 1
        %s647 = scalar_lea.sflag [#allocation4], %s646
        %s648 = sand.u32 %s138, 1
        %s649 = scalar_lea.vmem [#allocation3], %s648
        // Predicated region
        $region41: #{tpu_custom_call.1} parent=39 // pred_check
          %p650 = pneg %p148
        $region42: #{tpu_custom_call.1} parent=39 // pred_check_branch
          %652 = sbr.rel (%p650) target = $region44
        $region43: #{tpu_custom_call.1} parent=39 // pred_region
          %s654 = ssub.s32 16, 16
          %655 = vsyncadd %s647, %s654
          %s656 = smul.addr %s20, 16
          %s657 = scalar_lea.hbm %s5, %s656
          %s659 = sshll.u32 %s649, 4
          %s660 = int_to_ptr.vmem [resolvable:$true] %s659
          %662 = dma.vmem_to_hbm [thread:$0]  %s660, 16, %s657, %s647
        $region44: #{tpu_custom_call.1} parent=39 // pred_fallthru
          _
      $region40: #{tpu_custom_call.1} parent=5 // pred_fallthru
        _
      %p663 = scmp.le.s32.totalorder 2, %s15
      // Predicated region
      $region45: #{tpu_custom_call.1} parent=5 // pred_check
        %p664 = pneg %p663
      $region46: #{tpu_custom_call.1} parent=5 // pred_check_branch
        %666 = sbr.rel (%p664) target = $region48
      $region47: #{tpu_custom_call.1} parent=5 // pred_region
        %s667 = ssub.s32 %s15, 2
        // Predicated region
        $region49: #{tpu_custom_call.1} parent=47 // pred_check
          %p668 = pneg %p154
        $region50: #{tpu_custom_call.1} parent=47 // pred_check_branch
          %670 = sbr.rel (%p668) target = $region52
        $region51: #{tpu_custom_call.1} parent=47 // pred_region
          %s671 = sand.u32 %s139, 1
          %s672 = scalar_lea.sflag [#allocation4], %s671
          %s673 = sand.u32 %s139, 1
          %s674 = scalar_lea.vmem [#allocation3], %s673
          %675 = dma.done %s672, 16
        $region52: #{tpu_custom_call.1} parent=47 // pred_fallthru
          _
      $region48: #{tpu_custom_call.1} parent=5 // pred_fallthru
        _
    $region6: #{tpu_custom_call.1} parent=1 // loop_footer
      %s19 = sadd.s32 1, %s15
    $region7: #{tpu_custom_call.1} parent=1 // loop_footer_branch
      %14 = sbr.rel target = $region3
    $region8: #{tpu_custom_call.1} parent=1 // loop_exit
      _
    %676 = vsyncpa [#allocation4], 1
    %s677 = scalar_lea.sflag [#allocation4], 1
    %678 = vsyncpa %s677, 1

</llo_original>
